<compile_context>
chip_gen: v7x
topology: tpu7x:2x2x1
jax: 0.10.0
libtpu: 0.0.40
codegen_flags: <defaults>
</compile_context>

<pallas_src>
from functools import partial

import jax
import jax.numpy as jnp
from jax.experimental import pallas as pl
from jax.experimental.pallas import tpu as pltpu


LANE = 128
SUBLANE = 8
NCORES = 2  # leading "parallel" grid axis; both TCs on v7x, harmless on 1-TC chips


def _round_up(x, m):
    return (x + m - 1) // m * m


def _vmem_limit_bytes():
    """Per-generation scoped-VMEM budget: ~3/4 of physical VMEM, capped at 100 MiB.

    v5e/v6e (128 MiB physical) -> ~96-100 MiB; v7x (64 MiB) -> 48 MiB.
    Falls back to a v7x-safe 48 MiB if the hardware query is unavailable.
    """
    cap = 64 * 1024 * 1024
    try:
        info = pltpu.get_tpu_info()
        cap = int(getattr(info, "vmem_capacity_bytes", cap))
    except Exception:
        pass
    return min((cap * 3) // 4, 100 * 1024 * 1024)


def _pick_tile_rows(rows, width, in_bytes_per_elem, vmem_limit):
    """Largest sublane-aligned row tile whose pipelined footprint fits the budget.

    Footprint per block row: 3 inputs x 2 pipeline buffers in their HBM dtype
    plus ~3 block-sized f32 temporaries (x / log_sigmoid / vals chain) for the
    compute phase.  Only half the scoped limit is used, leaving headroom for
    the accumulator, semaphores and compiler-internal scratch.
    """
    per_row = width * (2 * in_bytes_per_elem + 3 * 4)
    budget = vmem_limit // 2
    t = max(SUBLANE, budget // per_row)
    t = min(t, max(SUBLANE, _round_up(rows, SUBLANE)))
    return max(SUBLANE, (t // SUBLANE) * SUBLANE)


def _wbce_kernel(x_ref, t_ref, w_ref, out_ref, acc_ref, *, neg_scale, final_scale):
    step = pl.program_id(1)

    @pl.when(step == 0)
    def _():
        acc_ref[...] = jnp.zeros_like(acc_ref)

    # Inputs may be bf16 in HBM; compute in f32 on all generations.
    x = x_ref[...].astype(jnp.float32)
    t = t_ref[...].astype(jnp.float32)
    w = w_ref[...].astype(jnp.float32)

    # Numerically stable, branch-free log_sigmoid:
    #   log_sigmoid(x)  = min(x, 0) - log1p(exp(-|x|))
    #   log_sigmoid(-x) = log_sigmoid(x) - x            (exact identity)
    ls = jnp.minimum(x, 0.0) - jnp.log1p(jnp.exp(-jnp.abs(x)))

    # vals = -t*log_sigmoid(x) - s*(1-t)*log_sigmoid(-x)
    #      = s*(1-t)*x - (t + s*(1-t)) * log_sigmoid(x)   (s folded at trace time)
    if neg_scale > 0:
        sneg = float(neg_scale) * (1.0 - t)
        vals = sneg * x - (t + sneg) * ls
    else:  # s == 1: classic BCE-with-logits form
        vals = (1.0 - t) * x - ls

    # Lane-resident accumulation: sublane-only reduce per step; the cross-lane
    # reduce and the single final scale are deferred to the finalize step.
    acc_ref[...] += jnp.sum(vals * w, axis=0, keepdims=True)

    @pl.when(step == pl.num_programs(1) - 1)
    def _():
        part = jnp.sum(acc_ref[...], axis=1, keepdims=True) * final_scale  # (1, 1)
        out_ref[...] = part.reshape(1, 1, 1)


def weighted_bce_loss(logits, targets, target_weights, neg_scale=-1,
                      bce_sum=False, tile_rows=None):
    assert logits.shape == targets.shape == target_weights.shape
    assert logits.ndim == 2
    B, N = logits.shape

    # Single compile-time scale, applied once in the finalize step.
    final_scale = (1.0 / float(B)) if bce_sum else (1.0 / float(B * N))

    in_bytes_per_elem = sum(a.dtype.itemsize for a in (logits, targets, target_weights))

    # ---- lane-dense layout: never waste lanes / DMA bytes on ragged N ----
    if N % LANE == 0:
        x2, t2, w2 = logits, targets, target_weights
        rows, width = B, N
    else:
        total = B * N
        width = min(1024, _round_up(total, LANE))
        rows = pl.cdiv(total, width)
        tail = rows * width - total

        def repack(a):
            flat = a.reshape(-1)
            if tail:
                flat = jnp.pad(flat, (0, tail))  # zero-weight padding -> zero loss
            return flat.reshape(rows, width)

        x2, t2, w2 = repack(logits), repack(targets), repack(target_weights)

    # ---- VMEM-aware tile selection ----
    vmem_limit = _vmem_limit_bytes()
    if tile_rows is None:
        tile_rows = _pick_tile_rows(rows, width, in_bytes_per_elem, vmem_limit)
    assert tile_rows % SUBLANE == 0, tile_rows

    # Pad rows so each of the NCORES parallel slices gets a whole number of tiles.
    rows_padded = _round_up(rows, NCORES * tile_rows)
    if rows_padded != rows:
        pad_r = rows_padded - rows
        x2 = jnp.pad(x2, ((0, pad_r), (0, 0)))
        t2 = jnp.pad(t2, ((0, pad_r), (0, 0)))
        w2 = jnp.pad(w2, ((0, pad_r), (0, 0)))  # zero weights -> zero contribution
    steps = rows_padded // (NCORES * tile_rows)

    kernel = partial(_wbce_kernel, neg_scale=neg_scale, final_scale=final_scale)
    in_map = lambda c, i: (c * steps + i, 0)

    cost = pl.CostEstimate(
        flops=int(14 * B * N),
        transcendentals=int(2 * B * N),
        bytes_accessed=int(B * N * in_bytes_per_elem) + 4,
    )

    out = pl.pallas_call(
        kernel,
        out_shape=jax.ShapeDtypeStruct((NCORES, 1, 1), jnp.float32),
        grid_spec=pltpu.PrefetchScalarGridSpec(
            num_scalar_prefetch=0,
            grid=(NCORES, steps),
            in_specs=[
                pl.BlockSpec((tile_rows, width), in_map),
                pl.BlockSpec((tile_rows, width), in_map),
                pl.BlockSpec((tile_rows, width), in_map),
            ],
            out_specs=pl.BlockSpec((1, 1, 1), lambda c, i: (c, 0, 0)),
            scratch_shapes=[pltpu.VMEM((1, width), jnp.float32)],
        ),
        compiler_params=pltpu.CompilerParams(
            dimension_semantics=("parallel", "arbitrary"),
            vmem_limit_bytes=vmem_limit,
        ),
        cost_estimate=cost,
    )(x2, t2, w2)  # no wrapper-side dtype cast: bf16 stays bf16 in HBM
    return jnp.sum(out)


def _reference(logits, targets, target_weights, neg_scale=-1, bce_sum=False):
    logits = logits.astype(jnp.float32)
    targets = targets.astype(jnp.float32)
    target_weights = target_weights.astype(jnp.float32)
    ls = jax.nn.log_sigmoid
    neg_vals = ls(-logits) * (1 - targets)
    if neg_scale > 0:
        neg_vals = neg_vals * neg_scale
    vals = -targets * ls(logits) - neg_vals
    losses = jnp.sum(vals * target_weights, axis=-1)
    if not bce_sum:
        losses = losses / logits.shape[1]
    return jnp.mean(losses)


if __name__ == "__main__":
    key = jax.random.PRNGKey(0)

    # --- small lane-aligned case: B=8, N=128 ---
    B, N = 8, 128
    k1, k2, k3 = jax.random.split(key, 3)
    logits = jax.random.normal(k1, (B, N), dtype=jnp.float32) * 2.0
    targets = jax.random.bernoulli(k2, 0.3, (B, N)).astype(jnp.float32)
    weights = jax.random.uniform(k3, (B, N), dtype=jnp.float32)

    loss = weighted_bce_loss(logits, targets, weights)
    jax.block_until_ready(loss)
    ref = _reference(logits, targets, weights)
    assert jnp.allclose(loss, ref, rtol=1e-5, atol=1e-5), (loss, ref)

    # --- neg_scale / bce_sum variants ---
    loss2 = weighted_bce_loss(logits, targets, weights, neg_scale=2.0, bce_sum=True)
    jax.block_until_ready(loss2)
    ref2 = _reference(logits, targets, weights, neg_scale=2.0, bce_sum=True)
    assert jnp.allclose(loss2, ref2, rtol=1e-5, atol=1e-5), (loss2, ref2)

    # --- ragged N=40 (exercises the lane-dense repack + zero-weight padding) ---
    B3, N3 = 16, 40
    k4, k5, k6 = jax.random.split(jax.random.PRNGKey(1), 3)
    logits3 = jax.random.normal(k4, (B3, N3), dtype=jnp.float32) * 3.0
    targets3 = jax.random.bernoulli(k5, 0.5, (B3, N3)).astype(jnp.float32)
    weights3 = jax.random.uniform(k6, (B3, N3), dtype=jnp.float32)

    loss3 = weighted_bce_loss(logits3, targets3, weights3)
    jax.block_until_ready(loss3)
    ref3 = _reference(logits3, targets3, weights3)
    assert jnp.allclose(loss3, ref3, rtol=1e-5, atol=1e-5), (loss3, ref3)

    # --- multi-step grid + cross-step accumulator: B=64, tile_rows=8 ---
    B4 = 64
    k7, k8, k9 = jax.random.split(jax.random.PRNGKey(2), 3)
    logits4 = jax.random.normal(k7, (B4, N), dtype=jnp.float32) * 3.0
    targets4 = jax.random.bernoulli(k8, 0.5, (B4, N)).astype(jnp.float32)
    weights4 = jax.random.uniform(k9, (B4, N), dtype=jnp.float32)

    loss4 = weighted_bce_loss(logits4, targets4, weights4, tile_rows=8)
    jax.block_until_ready(loss4)
    ref4 = _reference(logits4, targets4, weights4)
    assert jnp.allclose(loss4, ref4, rtol=1e-5, atol=1e-5), (loss4, ref4)

    # --- bf16 inputs end-to-end (half the HBM bytes; f32 math in-kernel) ---
    loss5 = weighted_bce_loss(logits4.astype(jnp.bfloat16),
                              targets4.astype(jnp.bfloat16),
                              weights4.astype(jnp.bfloat16), tile_rows=8)
    jax.block_until_ready(loss5)
    ref5 = _reference(logits4.astype(jnp.bfloat16),
                      targets4.astype(jnp.bfloat16),
                      weights4.astype(jnp.bfloat16))
    assert jnp.allclose(loss5, ref5, rtol=1e-4, atol=1e-4), (loss5, ref5)

    print("KERNEL_OK")
</pallas_src>

<mosaic_0001>
module attributes {stable_mosaic.version = 11 : i64} {
  func.func @_wbce_kernel(%arg0: i32, %arg1: i32, %arg2: memref<8x128xf32, #tpu.memory_space<vmem>>, %arg3: memref<8x128xf32, #tpu.memory_space<vmem>>, %arg4: memref<8x128xf32, #tpu.memory_space<vmem>>, %arg5: memref<1x1x1xf32, #tpu.memory_space<vmem>>, %arg6: memref<1x128xf32, #tpu.memory_space<vmem>>) attributes {dimension_semantics = [#tpu.dimension_semantics<parallel>, #tpu.dimension_semantics<arbitrary>], iteration_bounds = array<i64: 2, 1>, scalar_prefetch = 0 : i64, scratch_operands = 1 : i64, tpu.core_type = #tpu.core_type<tc>, window_params = [{transform_indices = @transform_0, window_bounds = array<i64: 8, 128>}, {transform_indices = @transform_1, window_bounds = array<i64: 8, 128>}, {transform_indices = @transform_2, window_bounds = array<i64: 8, 128>}, {transform_indices = @transform_3, window_bounds = array<i64: 1, 1, 1>}]} {
    %c0_i32 = arith.constant 0 : i32
    %0 = arith.cmpi eq, %arg1, %c0_i32 : i32
    %1 = arith.extui %0 : i1 to i32
    %c0_i32_0 = arith.constant 0 : i32
    %2 = arith.cmpi ne, %1, %c0_i32_0 : i32
    scf.if %2 {
      %cst_15 = arith.constant 0.000000e+00 : f32
      %27 = vector.broadcast %cst_15 : f32 to vector<1x128xf32>
      %c0_16 = arith.constant 0 : index
      %c0_17 = arith.constant 0 : index
      %28 = vector.load %arg6[%c0_16, %c0_17] : memref<1x128xf32, #tpu.memory_space<vmem>>, vector<1x128xf32>
      tpu.vector_store %arg6[%c0_16, %c0_17], %27 {strides = array<i32>} : memref<1x128xf32, #tpu.memory_space<vmem>>, vector<1x128xf32>,
    } else {
    }
    %c0 = arith.constant 0 : index
    %c0_1 = arith.constant 0 : index
    %3 = vector.load %arg2[%c0, %c0_1] : memref<8x128xf32, #tpu.memory_space<vmem>>, vector<8x128xf32>
    %c0_2 = arith.constant 0 : index
    %c0_3 = arith.constant 0 : index
    %4 = vector.load %arg3[%c0_2, %c0_3] : memref<8x128xf32, #tpu.memory_space<vmem>>, vector<8x128xf32>
    %c0_4 = arith.constant 0 : index
    %c0_5 = arith.constant 0 : index
    %5 = vector.load %arg4[%c0_4, %c0_5] : memref<8x128xf32, #tpu.memory_space<vmem>>, vector<8x128xf32>
    %cst = arith.constant 0.000000e+00 : f32
    %6 = vector.broadcast %cst : f32 to vector<8x128xf32>
    %7 = arith.minimumf %3, %6 : vector<8x128xf32>
    %8 = math.absf %3 : vector<8x128xf32>
    %cst_6 = arith.constant 0.000000e+00 : f32
    %9 = vector.broadcast %cst_6 : f32 to vector<8x128xf32>
    %10 = arith.subf %9, %8 : vector<8x128xf32>
    %11 = math.exp %10 : vector<8x128xf32>
    %12 = math.log1p %11 : vector<8x128xf32>
    %13 = arith.subf %7, %12 : vector<8x128xf32>
    %cst_7 = arith.constant 1.000000e+00 : f32
    %14 = vector.broadcast %cst_7 : f32 to vector<8x128xf32>
    %15 = arith.subf %14, %4 : vector<8x128xf32>
    %16 = arith.mulf %15, %3 : vector<8x128xf32>
    %17 = arith.subf %16, %13 : vector<8x128xf32>
    %c0_8 = arith.constant 0 : index
    %c0_9 = arith.constant 0 : index
    %18 = vector.load %arg6[%c0_8, %c0_9] : memref<1x128xf32, #tpu.memory_space<vmem>>, vector<1x128xf32>
    %19 = arith.mulf %17, %5 : vector<8x128xf32>
    %cst_10 = arith.constant dense<0.000000e+00> : vector<128xf32>
    %20 = vector.multi_reduction <add>, %19, %cst_10 [0] : vector<8x128xf32> to vector<128xf32>
    %21 = vector.shape_cast %20 : vector<128xf32> to vector<1x128xf32>
    %22 = arith.addf %18, %21 : vector<1x128xf32>
    %c0_11 = arith.constant 0 : index
    %c0_12 = arith.constant 0 : index
    %23 = vector.load %arg6[%c0_11, %c0_12] : memref<1x128xf32, #tpu.memory_space<vmem>>, vector<1x128xf32>
    tpu.vector_store %arg6[%c0_11, %c0_12], %22 {strides = array<i32>} : memref<1x128xf32, #tpu.memory_space<vmem>>, vector<1x128xf32>,
    %c0_i32_13 = arith.constant 0 : i32
    %24 = arith.cmpi eq, %arg1, %c0_i32_13 : i32
    %25 = arith.extui %24 : i1 to i32
    %c0_i32_14 = arith.constant 0 : i32
    %26 = arith.cmpi ne, %25, %c0_i32_14 : i32
    scf.if %26 {
      %c0_15 = arith.constant 0 : index
      %c0_16 = arith.constant 0 : index
      %27 = vector.load %arg6[%c0_15, %c0_16] : memref<1x128xf32, #tpu.memory_space<vmem>>, vector<1x128xf32>
      %cst_17 = arith.constant dense<0.000000e+00> : vector<1xf32>
      %28 = vector.multi_reduction <add>, %27, %cst_17 [1] : vector<1x128xf32> to vector<1xf32>
      %29 = vector.shape_cast %28 : vector<1xf32> to vector<1x1xf32>
      %cst_18 = arith.constant 9.765625E-4 : f32
      %30 = vector.broadcast %cst_18 : f32 to vector<1x1xf32>
      %31 = arith.mulf %29, %30 : vector<1x1xf32>
      %32 = vector.shape_cast %31 : vector<1x1xf32> to vector<1x1x1xf32>
      %c0_19 = arith.constant 0 : index
      %c0_20 = arith.constant 0 : index
      %c0_21 = arith.constant 0 : index
      %33 = vector.load %arg5[%c0_19, %c0_20, %c0_21] : memref<1x1x1xf32, #tpu.memory_space<vmem>>, vector<1x1x1xf32>
      tpu.vector_store %arg5[%c0_19, %c0_20, %c0_21], %32 {strides = array<i32>} : memref<1x1x1xf32, #tpu.memory_space<vmem>>, vector<1x1x1xf32>,
    } else {
    }
    return
  }
  func.func @transform_0(%arg0: i32, %arg1: i32) -> (i32, i32) {
    %c1_i32 = arith.constant 1 : i32
    %0 = arith.muli %arg0, %c1_i32 : i32
    %1 = arith.addi %0, %arg1 : i32
    %c0_i32 = arith.constant 0 : i32
    %c0_i32_0 = arith.constant 0 : i32
    return %1, %c0_i32 : i32, i32
  }
  func.func @transform_1(%arg0: i32, %arg1: i32) -> (i32, i32) {
    %c1_i32 = arith.constant 1 : i32
    %0 = arith.muli %arg0, %c1_i32 : i32
    %1 = arith.addi %0, %arg1 : i32
    %c0_i32 = arith.constant 0 : i32
    %c0_i32_0 = arith.constant 0 : i32
    return %1, %c0_i32 : i32, i32
  }
  func.func @transform_2(%arg0: i32, %arg1: i32) -> (i32, i32) {
    %c1_i32 = arith.constant 1 : i32
    %0 = arith.muli %arg0, %c1_i32 : i32
    %1 = arith.addi %0, %arg1 : i32
    %c0_i32 = arith.constant 0 : i32
    %c0_i32_0 = arith.constant 0 : i32
    return %1, %c0_i32 : i32, i32
  }
  func.func @transform_3(%arg0: i32, %arg1: i32) -> (i32, i32, i32) {
    %c0_i32 = arith.constant 0 : i32
    %c0_i32_0 = arith.constant 0 : i32
    %c0_i32_1 = arith.constant 0 : i32
    return %arg0, %c0_i32, %c0_i32_0 : i32, i32, i32
  }
}

</mosaic_0001>

<llo_original>
// kernel: tpu_custom_call.1
$region0: #{tpu_custom_call.1}
  #allocation0 [shape = 'u32[]', space=smem, size = 0x4, offset = 0x4, fixed_abs, tag = 'smem constant byte address 0x4 - core index']
  #allocation1 [shape = 'u32[144,128]{1,0:T(1,128)}', space=vmem, size = 0x12000, scoped, tag = 'internal scratch']
  #allocation2 [shape = 'f32[1,128]{1,0:T(1,128)}', space=vmem, size = 0x200, scoped, tag = 'scratch operand']
  %s0 = inlined_call_operand.hbm [shape: f32[16,128], index: 0, kind: input, shape index: {}]
  %s1 = inlined_call_operand.hbm [shape: f32[16,128], index: 1, kind: input, shape index: {}]
  %s2 = inlined_call_operand.hbm [shape: f32[16,128], index: 2, kind: input, shape index: {}]
  %s3 = inlined_call_operand.vmem [shape: f32[2,1,1], index: 3, kind: output, shape index: {}]
  %s4 = sld [smem:[#allocation0]]
  $region65: #{tpu_custom_call.1} parent=0
    _
  %s6 = ssub.s32 1, %s4
  %s7 = scalar_select 0, %s6, %s4
  $region1: #{tpu_custom_call.1} parent=0
    #allocation3 [shape = 'u8[8192]{0}', space=vmem, size = 0x2000, scoped, tag = 'input window, operand 0']
    #allocation4 [shape = 's32[2]{0}', space=sflag, size = 0x8, scoped, tag = 'scoped memory for tpu_custom_call.1']
    #allocation5 [shape = 'u8[8192]{0}', space=vmem, size = 0x2000, scoped, tag = 'input window, operand 1']
    #allocation6 [shape = 's32[2]{0}', space=sflag, size = 0x8, scoped, tag = 'scoped memory for tpu_custom_call.1']
    #allocation7 [shape = 'u8[8192]{0}', space=vmem, size = 0x2000, scoped, tag = 'input window, operand 2']
    %8 = vsyncpa [#allocation4], 0
    %s9 = scalar_lea.sflag [#allocation4], 1
    %10 = vsyncpa %s9, 0
    %11 = vsyncpa [#allocation6], 0
    %s12 = scalar_lea.sflag [#allocation6], 1
    %13 = vsyncpa %s12, 0
    loop: start=0, step=1, limit=4
    $region2: #{tpu_custom_call.1} parent=1 // loop_pre_header
      _
    $region3: #{tpu_custom_call.1} parent=1 // loop_header
      %s15 = sphi 0, %s19
      %p16 = scmp.ge.s32.totalorder %s15, 4
      %s22 = sphi 0, %s34
      %s23 = sphi 0, %s30
      %s24 = sphi 0, %s22
      %s25 = sphi 0, %s23
      %s26 = sphi 0, %s24
      %s27 = sphi 0, %s25
      %s39 = sphi 0, %s41
      %s42 = sphi 0, %s39
      %s43 = sphi 0, %s42
      %s59 = sphi 0, %s43
      %s67 = sphi 0, %s69
      %s70 = sphi 0, %s67
      %s71 = sphi 0, %s70
      %s87 = sphi 0, %s71
      %s95 = sphi 0, %s97
      %s98 = sphi 0, %s95
      %s99 = sphi 0, %s98
      %s115 = sphi 0, %s99
      %s121 = sphi 0, %s123
      %s124 = sphi 0, %s121
      %s125 = sphi 0, %s124
      %s141 = sphi 0, %s125
    $region4: #{tpu_custom_call.1} parent=1 // loop_header_branch
      %18 = sbr.rel (%p16) target = $region8
    $region5: #{tpu_custom_call.1} parent=1 // loop_body
      %s20 = ssub.s32 %s15, 1
      %s21 = ssub.s32 %s15, 2
      %s28 = sadd.s32 1, %s23
      %p29 = scmp.ge.s32.totalorder %s28, 1
      %s30 = scalar_select %p29, 0, %s28
      %s31 = sadd.s32 1, %s22
      %s32 = scalar_select %p29, %s31, %s22
      %p33 = scmp.ge.s32.totalorder %s32, 2
      %s34 = scalar_select %p33, 0, %s32
      %s35 = sadd.s32 %s22, %s23
      %s36 = sadd.s32 %s34, %s30
      %s37 = ssub.s32 %s35, %s36
      %p38 = scmp.eq.s32.totalorder %s37, 0
      %s40 = sadd.s32 %s39, 1
      %s41 = scalar_select %p38, %s39, %s40
      %p44 = pneg %p38
      %p45 = scmp.eq.s32.totalorder %s15, 1
      %p46 = por %p44, %p45
      %p47 = scmp.ne.s32.totalorder %s39, %s42
      %p48 = scmp.eq.s32.totalorder %s15, 0
      %p49 = por %p47, %p48
      %p50 = scmp.ne.s32.totalorder %s39, %s42
      %p51 = scmp.eq.s32.totalorder %s20, 1
      %p52 = por %p50, %p51
      %p53 = scmp.ne.s32.totalorder %s42, %s43
      %p54 = scmp.eq.s32.totalorder %s20, 0
      %p55 = por %p53, %p54
      %p56 = scmp.ne.s32.totalorder %s42, %s43
      %p57 = scmp.eq.s32.totalorder %s21, 1
      %p58 = por %p56, %p57
      %p60 = scmp.ne.s32.totalorder %s43, %s59
      %p61 = scmp.eq.s32.totalorder %s21, 0
      %p62 = por %p60, %p61
      %s63 = sadd.s32 %s22, %s23
      %s64 = sadd.s32 %s34, %s30
      %s65 = ssub.s32 %s63, %s64
      %p66 = scmp.eq.s32.totalorder %s65, 0
      %s68 = sadd.s32 %s67, 1
      %s69 = scalar_select %p66, %s67, %s68
      %p72 = pneg %p66
      %p73 = scmp.eq.s32.totalorder %s15, 1
      %p74 = por %p72, %p73
      %p75 = scmp.ne.s32.totalorder %s67, %s70
      %p76 = scmp.eq.s32.totalorder %s15, 0
      %p77 = por %p75, %p76
      %p78 = scmp.ne.s32.totalorder %s67, %s70
      %p79 = scmp.eq.s32.totalorder %s20, 1
      %p80 = por %p78, %p79
      %p81 = scmp.ne.s32.totalorder %s70, %s71
      %p82 = scmp.eq.s32.totalorder %s20, 0
      %p83 = por %p81, %p82
      %p84 = scmp.ne.s32.totalorder %s70, %s71
      %p85 = scmp.eq.s32.totalorder %s21, 1
      %p86 = por %p84, %p85
      %p88 = scmp.ne.s32.totalorder %s71, %s87
      %p89 = scmp.eq.s32.totalorder %s21, 0
      %p90 = por %p88, %p89
      %s91 = sadd.s32 %s22, %s23
      %s92 = sadd.s32 %s34, %s30
      %s93 = ssub.s32 %s91, %s92
      %p94 = scmp.eq.s32.totalorder %s93, 0
      %s96 = sadd.s32 %s95, 1
      %s97 = scalar_select %p94, %s95, %s96
      %p100 = pneg %p94
      %p101 = scmp.eq.s32.totalorder %s15, 1
      %p102 = por %p100, %p101
      %p103 = scmp.ne.s32.totalorder %s95, %s98
      %p104 = scmp.eq.s32.totalorder %s15, 0
      %p105 = por %p103, %p104
      %p106 = scmp.ne.s32.totalorder %s95, %s98
      %p107 = scmp.eq.s32.totalorder %s20, 1
      %p108 = por %p106, %p107
      %p109 = scmp.ne.s32.totalorder %s98, %s99
      %p110 = scmp.eq.s32.totalorder %s20, 0
      %p111 = por %p109, %p110
      %p112 = scmp.ne.s32.totalorder %s98, %s99
      %p113 = scmp.eq.s32.totalorder %s21, 1
      %p114 = por %p112, %p113
      %p116 = scmp.ne.s32.totalorder %s99, %s115
      %p117 = scmp.eq.s32.totalorder %s21, 0
      %p118 = por %p116, %p117
      %s119 = ssub.s32 %s22, %s34
      %p120 = scmp.eq.s32.totalorder %s119, 0
      %s122 = sadd.s32 %s121, 1
      %s123 = scalar_select %p120, %s121, %s122
      %p126 = pneg %p120
      %p127 = scmp.eq.s32.totalorder %s15, 1
      %p128 = por %p126, %p127
      %p129 = scmp.ne.s32.totalorder %s121, %s124
      %p130 = scmp.eq.s32.totalorder %s15, 0
      %p131 = por %p129, %p130
      %p132 = scmp.ne.s32.totalorder %s121, %s124
      %p133 = scmp.eq.s32.totalorder %s20, 1
      %p134 = por %p132, %p133
      %p135 = scmp.ne.s32.totalorder %s124, %s125
      %p136 = scmp.eq.s32.totalorder %s20, 0
      %p137 = por %p135, %p136
      %p138 = scmp.ne.s32.totalorder %s124, %s125
      %p139 = scmp.eq.s32.totalorder %s21, 1
      %p140 = por %p138, %p139
      %p142 = scmp.ne.s32.totalorder %s125, %s141
      %p143 = scmp.eq.s32.totalorder %s21, 0
      %p144 = por %p142, %p143
      %p145 = scmp.le.s32.totalorder 1, %s15
      %p146 = scmp.lt.s32.totalorder %s15, 3
      %p147 = pnand %p145, %p146
      %p148 = pneg %p147
      // Predicated region
      $region9: #{tpu_custom_call.1} parent=5 // pred_check
        _
      $region10: #{tpu_custom_call.1} parent=5 // pred_check_branch
        %150 = sbr.rel (%p147) target = $region12
      $region11: #{tpu_custom_call.1} parent=5 // pred_region
        %s151 = ssub.s32 %s15, 1
      $region12: #{tpu_custom_call.1} parent=5 // pred_fallthru
        _
      %p152 = scmp.lt.s32.totalorder %s15, 2
      // Predicated region
      $region13: #{tpu_custom_call.1} parent=5 // pred_check
        %p153 = pneg %p152
      $region14: #{tpu_custom_call.1} parent=5 // pred_check_branch
        %155 = sbr.rel (%p153) target = $region16
      $region15: #{tpu_custom_call.1} parent=5 // pred_region
        // Predicated region
        $region17: #{tpu_custom_call.1} parent=15 // pred_check
          %p156 = pneg %p49
        $region18: #{tpu_custom_call.1} parent=15 // pred_check_branch
          %158 = sbr.rel (%p156) target = $region20
        $region19: #{tpu_custom_call.1} parent=15 // pred_region
          %s159 = sand.u32 %s39, 1
          %s160 = scalar_lea.sflag [#allocation4], %s159
          %s161 = sand.u32 %s39, 1
          %s162 = smul.addr %s161, 8
          %s163 = scalar_lea.vmem [#allocation3], %s162
          %s164 = sadd.s32 %s22, %s23
          %s166 = ssub.s32 128, 128
          %167 = vsyncadd %s160, %s166
          %s168 = smul.addr %s164, 128
          %s169 = scalar_lea.hbm %s0, %s168
          %s171 = sshll.u32 %s163, 4
          %s172 = int_to_ptr.vmem [resolvable:$true] %s171
          %174 = dma.hbm_to_vmem [thread:$0]  %s169, 128, %s172, %s160
        $region20: #{tpu_custom_call.1} parent=15 // pred_fallthru
          _
        // Predicated region
        $region21: #{tpu_custom_call.1} parent=15 // pred_check
          %p175 = pneg %p77
        $region22: #{tpu_custom_call.1} parent=15 // pred_check_branch
          %177 = sbr.rel (%p175) target = $region24
        $region23: #{tpu_custom_call.1} parent=15 // pred_region
          %s178 = sand.u32 %s15, 1
          %s179 = scalar_lea.sflag [#allocation6], %s178
          %s180 = sand.u32 %s67, 1
          %s181 = smul.addr %s180, 8
          %s182 = scalar_lea.vmem [#allocation5], %s181
          %s183 = sadd.s32 %s22, %s23
          %s185 = ssub.s32 128, 128
          %186 = vsyncadd %s179, %s185
          %s187 = smul.addr %s183, 128
          %s188 = scalar_lea.hbm %s1, %s187
          %s190 = sshll.u32 %s182, 4
          %s191 = int_to_ptr.vmem [resolvable:$true] %s190
          %193 = dma.hbm_to_vmem [thread:$0]  %s188, 128, %s191, %s179
        $region24: #{tpu_custom_call.1} parent=15 // pred_fallthru
          _
        // Predicated region
        $region25: #{tpu_custom_call.1} parent=15 // pred_check
          %p194 = pneg %p105
        $region26: #{tpu_custom_call.1} parent=15 // pred_check_branch
          %196 = sbr.rel (%p194) target = $region28
        $region27: #{tpu_custom_call.1} parent=15 // pred_region
          %s197 = sand.u32 %s15, 1
          %s198 = scalar_lea.sflag [#allocation6], %s197
          %s199 = sand.u32 %s95, 1
          %s200 = smul.addr %s199, 8
          %s201 = scalar_lea.vmem [#allocation7], %s200
          %s202 = sadd.s32 %s22, %s23
          %s204 = ssub.s32 128, 128
          %205 = vsyncadd %s198, %s204
          %s206 = smul.addr %s202, 128
          %s207 = scalar_lea.hbm %s2, %s206
          %s209 = sshll.u32 %s201, 4
          %s210 = int_to_ptr.vmem [resolvable:$true] %s209
          %212 = dma.hbm_to_vmem [thread:$0]  %s207, 128, %s210, %s198
        $region28: #{tpu_custom_call.1} parent=15 // pred_fallthru
          _
      $region16: #{tpu_custom_call.1} parent=5 // pred_fallthru
        _
      %p213 = scmp.le.s32.totalorder 1, %s15
      %p214 = scmp.lt.s32.totalorder %s15, 3
      %p215 = pnand %p213, %p214
      %p216 = pneg %p215
      // Predicated region
      $region29: #{tpu_custom_call.1} parent=5 // pred_check
        _
      $region30: #{tpu_custom_call.1} parent=5 // pred_check_branch
        %218 = sbr.rel (%p215) target = $region32
      $region31: #{tpu_custom_call.1} parent=5 // pred_region
        %s219 = ssub.s32 %s15, 1
        %s220 = sand.u32 %s42, 1
        %s221 = scalar_lea.sflag [#allocation4], %s220
        %s222 = sand.u32 %s42, 1
        %s223 = smul.addr %s222, 8
        %s224 = scalar_lea.vmem [#allocation3], %s223
        // Predicated region
        $region33: #{tpu_custom_call.1} parent=31 // pred_check
          %p225 = pneg %p55
        $region34: #{tpu_custom_call.1} parent=31 // pred_check_branch
          %227 = sbr.rel (%p225) target = $region36
        $region35: #{tpu_custom_call.1} parent=31 // pred_region
          %228 = dma.done %s221, 128
        $region36: #{tpu_custom_call.1} parent=31 // pred_fallthru
          _
        %s229 = sand.u32 %s20, 1
        %s230 = scalar_lea.sflag [#allocation6], %s229
        %s231 = sand.u32 %s70, 1
        %s232 = smul.addr %s231, 8
        %s233 = scalar_lea.vmem [#allocation5], %s232
        // Predicated region
        $region37: #{tpu_custom_call.1} parent=31 // pred_check
          %p234 = pneg %p83
        $region38: #{tpu_custom_call.1} parent=31 // pred_check_branch
          %236 = sbr.rel (%p234) target = $region40
        $region39: #{tpu_custom_call.1} parent=31 // pred_region
          %237 = dma.done %s230, 128
        $region40: #{tpu_custom_call.1} parent=31 // pred_fallthru
          _
        %s238 = sand.u32 %s20, 1
        %s239 = scalar_lea.sflag [#allocation6], %s238
        %s240 = sand.u32 %s98, 1
        %s241 = smul.addr %s240, 8
        %s242 = scalar_lea.vmem [#allocation7], %s241
        // Predicated region
        $region41: #{tpu_custom_call.1} parent=31 // pred_check
          %p243 = pneg %p111
        $region42: #{tpu_custom_call.1} parent=31 // pred_check_branch
          %245 = sbr.rel (%p243) target = $region44
        $region43: #{tpu_custom_call.1} parent=31 // pred_region
          %246 = dma.done %s239, 128
        $region44: #{tpu_custom_call.1} parent=31 // pred_fallthru
          _
        %s247 = sand.u32 %s42, 1
        %s248 = scalar_lea.sflag [#allocation4], %s247
        %s249 = sand.u32 %s42, 1
        %s250 = smul.addr %s249, 8
        %s251 = scalar_lea.vmem [#allocation3], %s250
        %p252 = pneg %p55
        %p253 = pneg %p52
        %s254 = sand.u32 %s20, 1
        %s255 = scalar_lea.sflag [#allocation6], %s254
        %s256 = sand.u32 %s70, 1
        %s257 = smul.addr %s256, 8
        %s258 = scalar_lea.vmem [#allocation5], %s257
        %p259 = pneg %p83
        %p260 = pneg %p80
        %s261 = sand.u32 %s20, 1
        %s262 = scalar_lea.sflag [#allocation6], %s261
        %s263 = sand.u32 %s98, 1
        %s264 = smul.addr %s263, 8
        %s265 = scalar_lea.vmem [#allocation7], %s264
        %p266 = pneg %p111
        %p267 = pneg %p108
        %p268 = pneg %p137
        %p269 = pneg %p134
        %p270 = scmp.lt.s32.totalorder %s24, 1
        %s271 = scalar_select %p270, %s24, 1
        %s272 = scalar_lea.vmem %s3, %s271
        %s273 = sadd.s32 %s24, %s25
        %s274 = sadd.s32 %s24, %s25
        %s275 = sadd.s32 %s24, %s25
        %p276 = scmp.lt.s32.totalorder %s24, 1
        %s277 = scalar_select %p276, %s24, 1
        %s278 = scalar_lea.vmem %s3, %s277
        %p279 = scmp.eq.s32.totalorder %s25, 0
        // Predicated region
        $region45: #{tpu_custom_call.1} parent=31 // pred_check
          %p280 = pneg %p279
        $region46: #{tpu_custom_call.1} parent=31 // pred_check_branch
          %282 = sbr.rel (%p280) target = $region48
        $region47: #{tpu_custom_call.1} parent=31 // pred_region
          %283 = vst [vmem:[#allocation2] sm:$0x1] 0.0
        $region48: #{tpu_custom_call.1} parent=31 // pred_fallthru
          _
        %v284 = vld [vmem:[%s224] sm:$0xff]
        %v285 = vld [vmem:[%s233] sm:$0xff]
        %v286 = vld [vmem:[%s242] sm:$0xff]
        %v287 = vmin.f32 %v284, 0.0
        %v288 = vand.u32 2147483647, %v284
        %v289 = vsub.f32 0.0, %v288
        %v290 = vmul.f32 %v289, 1.442695
        %v291 = vpow.pop %v290
        %v292 = vadd.f32 %v291, 1.0
        %v293 = vlog2.pop %v292
        %v294 = vmul.f32 %v293, 0.6931472
        %v295 = vmul.f32 -0.5, %v291
        %v296 = vadd.f32 %v295, 1.0
        %v297 = vmul.f32 %v296, %v291
        %v298 = vand.u32 2147483647, %v291
        %vm299 = vcmp.lt.f32.partialorder %v298, 0.0004427343
        %v300 = vsel %vm299, %v297, %v294
        %v301 = vsub.f32 %v287, %v300
        %v302 = vsub.f32 1.0, %v285
        %v303 = vmul.f32 %v302, %v284
        %v304 = vsub.f32 %v303, %v301
        %v305 = vld [vmem:[#allocation2] sm:$0x1]
        %v306 = vmul.f32 %v304, %v286
        %v307 = vrot.slane %v306, 4
        %v308 = vadd.f32 %v306, %v307
        %v309 = vrot.slane %v308, 2
        %v310 = vadd.f32 %v308, %v309
        %v311 = vrot.slane %v310, 1
        %v312 = vadd.f32 %v310, %v311
        %v313 = vadd.f32 %v305, %v312
        %314 = vst [vmem:[#allocation2] sm:$0x1] %v313
        // Predicated region
        $region49: #{tpu_custom_call.1} parent=31 // pred_check
          %p315 = pneg %p279
        $region50: #{tpu_custom_call.1} parent=31 // pred_check_branch
          %317 = sbr.rel (%p315) target = $region52
        $region51: #{tpu_custom_call.1} parent=31 // pred_region
          %v318 = vld [vmem:[#allocation2] sm:$0x1]
          %vm319 = vcmask 1040384
          %v320 = vsel %vm319, %v318, 0.0
          %321 = vadd.xlane.f32.xlu0 %v320
          %v322 = vpop.xlane.xlu0 %321
          %v323 = vmul.f32 %v322, 0.0009765625
          %vm324 = vcmask 0
          %325 = vst.msk [vmem:[%s278] sm:$0x1] %vm324, %v323
        $region52: #{tpu_custom_call.1} parent=31 // pred_fallthru
          _
        %p326 = scmp.lt.s32.totalorder %s24, 1
        %s327 = scalar_select %p326, %s24, 1
        %s328 = scalar_lea.vmem %s3, %s327
        // Predicated region
        $region53: #{tpu_custom_call.1} parent=31 // pred_check
          %p329 = pneg %p134
        $region54: #{tpu_custom_call.1} parent=31 // pred_check_branch
          %331 = sbr.rel (%p329) target = $region56
        $region55: #{tpu_custom_call.1} parent=31 // pred_region
          _
        $region56: #{tpu_custom_call.1} parent=31 // pred_fallthru
          _
      $region32: #{tpu_custom_call.1} parent=5 // pred_fallthru
        _
      %p332 = scmp.le.s32.totalorder 2, %s15
      // Predicated region
      $region57: #{tpu_custom_call.1} parent=5 // pred_check
        %p333 = pneg %p332
      $region58: #{tpu_custom_call.1} parent=5 // pred_check_branch
        %335 = sbr.rel (%p333) target = $region60
      $region59: #{tpu_custom_call.1} parent=5 // pred_region
        %s336 = ssub.s32 %s15, 2
        // Predicated region
        $region61: #{tpu_custom_call.1} parent=59 // pred_check
          %p337 = pneg %p140
        $region62: #{tpu_custom_call.1} parent=59 // pred_check_branch
          %339 = sbr.rel (%p337) target = $region64
        $region63: #{tpu_custom_call.1} parent=59 // pred_region
          %p340 = scmp.lt.s32.totalorder %s26, 1
          %s341 = scalar_select %p340, %s26, 1
          %s342 = scalar_lea.vmem %s3, %s341
        $region64: #{tpu_custom_call.1} parent=59 // pred_fallthru
          _
      $region60: #{tpu_custom_call.1} parent=5 // pred_fallthru
        _
    $region6: #{tpu_custom_call.1} parent=1 // loop_footer
      %s19 = sadd.s32 1, %s15
    $region7: #{tpu_custom_call.1} parent=1 // loop_footer_branch
      %14 = sbr.rel target = $region3
    $region8: #{tpu_custom_call.1} parent=1 // loop_exit
      _
    %343 = vsyncpa [#allocation4], 1
    %s344 = scalar_lea.sflag [#allocation4], 1
    %345 = vsyncpa %s344, 1
    %346 = vsyncpa [#allocation6], 1
    %s347 = scalar_lea.sflag [#allocation6], 1
    %348 = vsyncpa %s347, 1

</llo_original>
